<compile_context>
chip_gen: v5e
topology: v5e:2x2
jax: 0.10.0
libtpu: 0.0.40
codegen_flags: <defaults>
</compile_context>

<pallas_src>
import functools

import jax
import jax.numpy as jnp
from jax.experimental import pallas as pl
from jax.experimental.pallas import tpu as pltpu


def _set_encoder_kernel(num_layers, inv_n,
                        x_ref, y_ref, red_ref, wx_ref, wy_ref, b0_ref, *rest):
    """One grid step processes TB batch elements (TB*N rows).

    x_ref  : (TB*N, dx)    f32 (cast to bf16 in-kernel)
    y_ref  : (TB*N, dy)    f32
    red_ref: (TB, TB*N)    bf16  0/1 block-diagonal mean reducer (hoisted const)
    wx_ref : (dx, d0) bf16   wy_ref: (dy, d0) bf16   b0_ref: (1, d0) f32
    rest   : (w1, b1, ..., w_{L-1}, b_{L-1}, out_ref)
    """
    param_refs = rest[:-1]
    o_ref = rest[-1]

    # Layer 0: fused "concat" -> x @ Wx + y @ Wy + b0 (bf16 MXU operands,
    # f32 accumulation; the bf16 cast happens here, not in a separate XLA pass).
    x = x_ref[...].astype(jnp.bfloat16)
    y = y_ref[...].astype(jnp.bfloat16)
    h = (jnp.dot(x, wx_ref[...], preferred_element_type=jnp.float32)
         + jnp.dot(y, wy_ref[...], preferred_element_type=jnp.float32)
         + b0_ref[...])
    h = jnp.maximum(h, 0.0)                                   # ReLU in f32

    # Remaining layers (ReLU after every Linear, including the last one —
    # matches the torch module, which appends `nl` after the final Linear).
    for layer in range(num_layers - 1):
        w_ref = param_refs[2 * layer]                         # (d_in, d_out) bf16
        b_ref = param_refs[2 * layer + 1]                     # (1, d_out)    f32
        h = jnp.dot(h.astype(jnp.bfloat16), w_ref[...],
                    preferred_element_type=jnp.float32) + b_ref[...]
        h = jnp.maximum(h, 0.0)

    # Per-batch-element mean over the set dim on the MXU:
    # 0/1 block-diagonal reducer (bf16, exact) x bf16 h -> f32, then scale 1/N.
    out = jnp.dot(red_ref[...], h.astype(jnp.bfloat16),
                  preferred_element_type=jnp.float32) * inv_n
    o_ref[...] = out.astype(o_ref.dtype)


def _pick_block_batch(B, N, max_width):
    """Pick TB (batch elements per grid step).

    Legality: the output block (TB, out) needs TB % 8 == 0 or TB == B; the
    (f32) activation blocks (TB*N, d) then automatically satisfy %8 too.
    Size: target ~<=2 MiB for the widest f32 intermediate (TB*N, max_width),
    capped at 2048 rows, to amortize per-grid-step overhead with large DMAs.
    Prefer >=2 grid steps when a decent smaller tile exists (v7x has 2 TCs
    that only split the "parallel" batch axis).
    """
    rows_budget = max(64, min(2048, (2 << 20) // max(4 * max_width, 1)))
    legal = [c for c in range(1, B + 1)
             if B % c == 0 and (c == B or c % 8 == 0)]
    under = [c for c in legal if c * N <= rows_budget]
    tb = max(under) if under else min(legal)
    if tb == B:
        smaller = [c for c in legal if c < B and c * N >= 256]
        if smaller:
            tb = max(smaller)
    return tb


def _padded_bytes(shape, itemsize):
    r, c = shape
    return ((r + 7) // 8 * 8) * ((c + 127) // 128 * 128) * itemsize


def set_encoder_forward(context_x, context_y, weights, biases, *,
                        block_batch=None):
    """context_x: (B, N, dx), context_y: (B, N, dy).

    weights[i]: (d_in_i, d_out_i)  (already transposed vs. torch layout)
    biases[i]:  (1, d_out_i)
    Returns (B, out_features) = mean over the set dim of the MLP output.
    """
    B, N, dx = context_x.shape
    dy = context_y.shape[-1]
    num_layers = len(weights)
    out_features = weights[-1].shape[-1]
    out_dtype = context_x.dtype
    max_width = max([w.shape[-1] for w in weights] + [dx + dy])

    tb = _pick_block_batch(B, N, max_width) if block_batch is None else block_batch
    assert B % tb == 0, "block_batch must divide B"
    rows = tb * N

    # Activations stay f32 in HBM (no wrapper .astype pass); flatten (B, N)
    # into a row dimension (free, contiguous reshape). Weights are cast to
    # bf16 once (tiny), biases stay f32.
    xf = context_x.reshape(B * N, dx)
    yf = context_y.reshape(B * N, dy)
    wx = weights[0][:dx].astype(jnp.bfloat16)                 # (dx, d0)
    wy = weights[0][dx:].astype(jnp.bfloat16)                 # (dy, d0)
    b0 = biases[0].astype(jnp.float32)

    # Hoisted 0/1 block-diagonal reducer: row j sums local rows [j*N, (j+1)*N).
    reducer = jnp.repeat(jnp.eye(tb, dtype=jnp.float32), N, axis=1)
    reducer = reducer.astype(jnp.bfloat16)                    # (tb, tb*N), exact

    kernel = functools.partial(_set_encoder_kernel, num_layers, 1.0 / N)

    def const_spec(shape):
        return pl.BlockSpec(shape, lambda i: (0, 0))

    in_specs = [
        pl.BlockSpec((rows, dx), lambda i: (i, 0)),           # x rows (f32)
        pl.BlockSpec((rows, dy), lambda i: (i, 0)),           # y rows (f32)
        const_spec(reducer.shape),
        const_spec(wx.shape), const_spec(wy.shape), const_spec(b0.shape),
    ]
    inputs = [xf, yf, reducer, wx, wy, b0]
    for w, b in zip(weights[1:], biases[1:]):
        w_bf16 = w.astype(jnp.bfloat16)
        b_f32 = b.astype(jnp.float32)
        in_specs.append(const_spec(w_bf16.shape))
        in_specs.append(const_spec(b_f32.shape))
        inputs.extend([w_bf16, b_f32])

    # VMEM budget from actual (layout-padded) tile sizes, double-buffered,
    # plus headroom for f32 intermediates; floor 16 MiB, cap well under 64 MiB.
    est = 2 * (_padded_bytes((rows, dx), 4) + _padded_bytes((rows, dy), 4))
    est += 2 * _padded_bytes((tb, out_features), jnp.dtype(out_dtype).itemsize)
    for arr in inputs[2:]:
        est += 2 * _padded_bytes(arr.shape, arr.dtype.itemsize)
    est += 4 * _padded_bytes((rows, max_width), 4)
    vmem_limit = int(min(max(2 * est, 16 << 20), 56 << 20))

    out = pl.pallas_call(
        kernel,
        out_shape=jax.ShapeDtypeStruct((B, out_features), out_dtype),
        grid_spec=pltpu.PrefetchScalarGridSpec(
            num_scalar_prefetch=0,
            grid=(B // tb,),
            in_specs=in_specs,
            out_specs=pl.BlockSpec((tb, out_features), lambda i: (i, 0)),
        ),
        compiler_params=pltpu.CompilerParams(
            dimension_semantics=("parallel",),       # batch axis is independent
            vmem_limit_bytes=vmem_limit,
        ),
    )(*inputs)

    return out                                        # (B, out_features)


def init_set_encoder_params(key, in_features, out_features, num_hidden_layers,
                            hidden_features):
    """Kaiming-normal (fan_in, relu) weights (matches init_weights_normal);
    biases use nn.Linear's default uniform init."""
    dims = ([in_features] + [hidden_features] * (num_hidden_layers + 1)
            + [out_features])
    weights, biases = [], []
    for i in range(len(dims) - 1):
        d_in, d_out = dims[i], dims[i + 1]
        key, kw, kb = jax.random.split(key, 3)
        std = (2.0 / d_in) ** 0.5                    # kaiming_normal, relu, fan_in
        w = std * jax.random.normal(kw, (d_in, d_out), jnp.float32)
        bound = 1.0 / (d_in ** 0.5)
        b = jax.random.uniform(kb, (1, d_out), jnp.float32, -bound, bound)
        weights.append(w)
        biases.append(b)
    return weights, biases


def _reference_forward(context_x, context_y, weights, biases):
    h = jnp.concatenate([context_x, context_y], axis=-1)
    for w, b in zip(weights, biases):
        h = jnp.maximum(h @ w + b, 0.0)
    return h.mean(axis=-2)


if __name__ == "__main__":
    # SetEncoder(in_features=8, out_features=16, num_hidden_layers=2,
    #            hidden_features=32)
    B, N = 2, 8
    dx, dy = 4, 4
    in_features = dx + dy
    hidden_features = 32
    out_features = 16
    num_hidden_layers = 2

    key = jax.random.PRNGKey(0)
    kx, ky, kp = jax.random.split(key, 3)
    context_x = jax.random.normal(kx, (B, N, dx), jnp.float32)
    context_y = jax.random.normal(ky, (B, N, dy), jnp.float32)

    weights, biases = init_set_encoder_params(
        kp, in_features, out_features, num_hidden_layers, hidden_features)

    out = set_encoder_forward(context_x, context_y, weights, biases)
    out = jax.block_until_ready(out)

    ref = _reference_forward(context_x, context_y, weights, biases)
    assert out.shape == (B, out_features)
    # bf16 MXU operands with f32 accumulation -> relaxed tolerance vs f32 ref.
    assert jnp.allclose(out, ref, atol=5e-2, rtol=5e-2), "mismatch vs JAX reference"

    print("KERNEL_OK")
</pallas_src>

<mosaic_0001>
module attributes {stable_mosaic.version = 11 : i64} {
  func.func @_set_encoder_kernel(%arg0: i32, %arg1: memref<16x4xf32, #tpu.memory_space<vmem>>, %arg2: memref<16x4xf32, #tpu.memory_space<vmem>>, %arg3: memref<2x16xbf16, #tpu.memory_space<vmem>>, %arg4: memref<4x32xbf16, #tpu.memory_space<vmem>>, %arg5: memref<4x32xbf16, #tpu.memory_space<vmem>>, %arg6: memref<1x32xf32, #tpu.memory_space<vmem>>, %arg7: memref<32x32xbf16, #tpu.memory_space<vmem>>, %arg8: memref<1x32xf32, #tpu.memory_space<vmem>>, %arg9: memref<32x32xbf16, #tpu.memory_space<vmem>>, %arg10: memref<1x32xf32, #tpu.memory_space<vmem>>, %arg11: memref<32x16xbf16, #tpu.memory_space<vmem>>, %arg12: memref<1x16xf32, #tpu.memory_space<vmem>>, %arg13: memref<2x16xf32, #tpu.memory_space<vmem>>) attributes {dimension_semantics = [#tpu.dimension_semantics<parallel>], iteration_bounds = array<i64: 1>, scalar_prefetch = 0 : i64, scratch_operands = 0 : i64, tpu.core_type = #tpu.core_type<tc>, window_params = [{transform_indices = @transform_0, window_bounds = array<i64: 16, 4>}, {transform_indices = @transform_1, window_bounds = array<i64: 16, 4>}, {pipeline_mode = #tpu.pipeline_mode<synchronous>, transform_indices = @transform_2, window_bounds = array<i64: 2, 16>}, {pipeline_mode = #tpu.pipeline_mode<synchronous>, transform_indices = @transform_3, window_bounds = array<i64: 4, 32>}, {pipeline_mode = #tpu.pipeline_mode<synchronous>, transform_indices = @transform_4, window_bounds = array<i64: 4, 32>}, {pipeline_mode = #tpu.pipeline_mode<synchronous>, transform_indices = @transform_5, window_bounds = array<i64: 1, 32>}, {pipeline_mode = #tpu.pipeline_mode<synchronous>, transform_indices = @transform_6, window_bounds = array<i64: 32, 32>}, {pipeline_mode = #tpu.pipeline_mode<synchronous>, transform_indices = @transform_7, window_bounds = array<i64: 1, 32>}, {pipeline_mode = #tpu.pipeline_mode<synchronous>, transform_indices = @transform_8, window_bounds = array<i64: 32, 32>}, {pipeline_mode = #tpu.pipeline_mode<synchronous>, transform_indices = @transform_9, window_bounds = array<i64: 1, 32>}, {pipeline_mode = #tpu.pipeline_mode<synchronous>, transform_indices = @transform_10, window_bounds = array<i64: 32, 16>}, {pipeline_mode = #tpu.pipeline_mode<synchronous>, transform_indices = @transform_11, window_bounds = array<i64: 1, 16>}, {transform_indices = @transform_12, window_bounds = array<i64: 2, 16>}]} {
    %c0 = arith.constant 0 : index
    %c0_0 = arith.constant 0 : index
    %0 = vector.load %arg1[%c0, %c0_0] : memref<16x4xf32, #tpu.memory_space<vmem>>, vector<16x4xf32>
    %1 = arith.truncf %0 : vector<16x4xf32> to vector<16x4xbf16>
    %c0_1 = arith.constant 0 : index
    %c0_2 = arith.constant 0 : index
    %2 = vector.load %arg2[%c0_1, %c0_2] : memref<16x4xf32, #tpu.memory_space<vmem>>, vector<16x4xf32>
    %3 = arith.truncf %2 : vector<16x4xf32> to vector<16x4xbf16>
    %c0_3 = arith.constant 0 : index
    %c0_4 = arith.constant 0 : index
    %4 = vector.load %arg4[%c0_3, %c0_4] : memref<4x32xbf16, #tpu.memory_space<vmem>>, vector<4x32xbf16>
    %cst = arith.constant dense<0.000000e+00> : vector<16x32xf32>
    %5 = tpu.matmul %1, %4, %cst {dimension_numbers = #tpu.dot_dimension_numbers<[1], [0], [0], [1], [0, 0, 1, 1], [], []>} : vector<16x4xbf16>, vector<4x32xbf16>, vector<16x32xf32> -> vector<16x32xf32>
    %c0_5 = arith.constant 0 : index
    %c0_6 = arith.constant 0 : index
    %6 = vector.load %arg5[%c0_5, %c0_6] : memref<4x32xbf16, #tpu.memory_space<vmem>>, vector<4x32xbf16>
    %cst_7 = arith.constant dense<0.000000e+00> : vector<16x32xf32>
    %7 = tpu.matmul %3, %6, %cst_7 {dimension_numbers = #tpu.dot_dimension_numbers<[1], [0], [0], [1], [0, 0, 1, 1], [], []>} : vector<16x4xbf16>, vector<4x32xbf16>, vector<16x32xf32> -> vector<16x32xf32>
    %8 = arith.addf %5, %7 : vector<16x32xf32>
    %c0_8 = arith.constant 0 : index
    %c0_9 = arith.constant 0 : index
    %9 = vector.load %arg6[%c0_8, %c0_9] : memref<1x32xf32, #tpu.memory_space<vmem>>, vector<1x32xf32>
    %10 = vector.broadcast %9 : vector<1x32xf32> to vector<16x32xf32>
    %11 = arith.addf %8, %10 : vector<16x32xf32>
    %cst_10 = arith.constant 0.000000e+00 : f32
    %12 = vector.broadcast %cst_10 : f32 to vector<16x32xf32>
    %13 = arith.maximumf %11, %12 : vector<16x32xf32>
    %14 = arith.truncf %13 : vector<16x32xf32> to vector<16x32xbf16>
    %c0_11 = arith.constant 0 : index
    %c0_12 = arith.constant 0 : index
    %15 = vector.load %arg7[%c0_11, %c0_12] : memref<32x32xbf16, #tpu.memory_space<vmem>>, vector<32x32xbf16>
    %cst_13 = arith.constant dense<0.000000e+00> : vector<16x32xf32>
    %16 = tpu.matmul %14, %15, %cst_13 {dimension_numbers = #tpu.dot_dimension_numbers<[1], [0], [0], [1], [0, 0, 1, 1], [], []>} : vector<16x32xbf16>, vector<32x32xbf16>, vector<16x32xf32> -> vector<16x32xf32>
    %c0_14 = arith.constant 0 : index
    %c0_15 = arith.constant 0 : index
    %17 = vector.load %arg8[%c0_14, %c0_15] : memref<1x32xf32, #tpu.memory_space<vmem>>, vector<1x32xf32>
    %18 = vector.broadcast %17 : vector<1x32xf32> to vector<16x32xf32>
    %19 = arith.addf %16, %18 : vector<16x32xf32>
    %cst_16 = arith.constant 0.000000e+00 : f32
    %20 = vector.broadcast %cst_16 : f32 to vector<16x32xf32>
    %21 = arith.maximumf %19, %20 : vector<16x32xf32>
    %22 = arith.truncf %21 : vector<16x32xf32> to vector<16x32xbf16>
    %c0_17 = arith.constant 0 : index
    %c0_18 = arith.constant 0 : index
    %23 = vector.load %arg9[%c0_17, %c0_18] : memref<32x32xbf16, #tpu.memory_space<vmem>>, vector<32x32xbf16>
    %cst_19 = arith.constant dense<0.000000e+00> : vector<16x32xf32>
    %24 = tpu.matmul %22, %23, %cst_19 {dimension_numbers = #tpu.dot_dimension_numbers<[1], [0], [0], [1], [0, 0, 1, 1], [], []>} : vector<16x32xbf16>, vector<32x32xbf16>, vector<16x32xf32> -> vector<16x32xf32>
    %c0_20 = arith.constant 0 : index
    %c0_21 = arith.constant 0 : index
    %25 = vector.load %arg10[%c0_20, %c0_21] : memref<1x32xf32, #tpu.memory_space<vmem>>, vector<1x32xf32>
    %26 = vector.broadcast %25 : vector<1x32xf32> to vector<16x32xf32>
    %27 = arith.addf %24, %26 : vector<16x32xf32>
    %cst_22 = arith.constant 0.000000e+00 : f32
    %28 = vector.broadcast %cst_22 : f32 to vector<16x32xf32>
    %29 = arith.maximumf %27, %28 : vector<16x32xf32>
    %30 = arith.truncf %29 : vector<16x32xf32> to vector<16x32xbf16>
    %c0_23 = arith.constant 0 : index
    %c0_24 = arith.constant 0 : index
    %31 = vector.load %arg11[%c0_23, %c0_24] : memref<32x16xbf16, #tpu.memory_space<vmem>>, vector<32x16xbf16>
    %cst_25 = arith.constant dense<0.000000e+00> : vector<16x16xf32>
    %32 = tpu.matmul %30, %31, %cst_25 {dimension_numbers = #tpu.dot_dimension_numbers<[1], [0], [0], [1], [0, 0, 1, 1], [], []>} : vector<16x32xbf16>, vector<32x16xbf16>, vector<16x16xf32> -> vector<16x16xf32>
    %c0_26 = arith.constant 0 : index
    %c0_27 = arith.constant 0 : index
    %33 = vector.load %arg12[%c0_26, %c0_27] : memref<1x16xf32, #tpu.memory_space<vmem>>, vector<1x16xf32>
    %34 = vector.broadcast %33 : vector<1x16xf32> to vector<16x16xf32>
    %35 = arith.addf %32, %34 : vector<16x16xf32>
    %cst_28 = arith.constant 0.000000e+00 : f32
    %36 = vector.broadcast %cst_28 : f32 to vector<16x16xf32>
    %37 = arith.maximumf %35, %36 : vector<16x16xf32>
    %c0_29 = arith.constant 0 : index
    %c0_30 = arith.constant 0 : index
    %38 = vector.load %arg3[%c0_29, %c0_30] : memref<2x16xbf16, #tpu.memory_space<vmem>>, vector<2x16xbf16>
    %39 = arith.truncf %37 : vector<16x16xf32> to vector<16x16xbf16>
    %cst_31 = arith.constant dense<0.000000e+00> : vector<2x16xf32>
    %40 = tpu.matmul %38, %39, %cst_31 {dimension_numbers = #tpu.dot_dimension_numbers<[1], [0], [0], [1], [0, 0, 1, 1], [], []>} : vector<2x16xbf16>, vector<16x16xbf16>, vector<2x16xf32> -> vector<2x16xf32>
    %cst_32 = arith.constant 1.250000e-01 : f32
    %41 = vector.broadcast %cst_32 : f32 to vector<2x16xf32>
    %42 = arith.mulf %40, %41 : vector<2x16xf32>
    %c0_33 = arith.constant 0 : index
    %c0_34 = arith.constant 0 : index
    %43 = vector.load %arg13[%c0_33, %c0_34] : memref<2x16xf32, #tpu.memory_space<vmem>>, vector<2x16xf32>
    tpu.vector_store %arg13[%c0_33, %c0_34], %42 {strides = array<i32>} : memref<2x16xf32, #tpu.memory_space<vmem>>, vector<2x16xf32>,
    return
  }
  func.func @transform_0(%arg0: i32) -> (i32, i32) {
    %c0_i32 = arith.constant 0 : i32
    %c0_i32_0 = arith.constant 0 : i32
    return %arg0, %c0_i32 : i32, i32
  }
  func.func @transform_1(%arg0: i32) -> (i32, i32) {
    %c0_i32 = arith.constant 0 : i32
    %c0_i32_0 = arith.constant 0 : i32
    return %arg0, %c0_i32 : i32, i32
  }
  func.func @transform_2(%arg0: i32) -> (i32, i32) {
    %c0_i32 = arith.constant 0 : i32
    %c0_i32_0 = arith.constant 0 : i32
    %c0_i32_1 = arith.constant 0 : i32
    return %c0_i32, %c0_i32_0 : i32, i32
  }
  func.func @transform_3(%arg0: i32) -> (i32, i32) {
    %c0_i32 = arith.constant 0 : i32
    %c0_i32_0 = arith.constant 0 : i32
    %c0_i32_1 = arith.constant 0 : i32
    return %c0_i32, %c0_i32_0 : i32, i32
  }
  func.func @transform_4(%arg0: i32) -> (i32, i32) {
    %c0_i32 = arith.constant 0 : i32
    %c0_i32_0 = arith.constant 0 : i32
    %c0_i32_1 = arith.constant 0 : i32
    return %c0_i32, %c0_i32_0 : i32, i32
  }
  func.func @transform_5(%arg0: i32) -> (i32, i32) {
    %c0_i32 = arith.constant 0 : i32
    %c0_i32_0 = arith.constant 0 : i32
    %c0_i32_1 = arith.constant 0 : i32
    return %c0_i32, %c0_i32_0 : i32, i32
  }
  func.func @transform_6(%arg0: i32) -> (i32, i32) {
    %c0_i32 = arith.constant 0 : i32
    %c0_i32_0 = arith.constant 0 : i32
    %c0_i32_1 = arith.constant 0 : i32
    return %c0_i32, %c0_i32_0 : i32, i32
  }
  func.func @transform_7(%arg0: i32) -> (i32, i32) {
    %c0_i32 = arith.constant 0 : i32
    %c0_i32_0 = arith.constant 0 : i32
    %c0_i32_1 = arith.constant 0 : i32
    return %c0_i32, %c0_i32_0 : i32, i32
  }
  func.func @transform_8(%arg0: i32) -> (i32, i32) {
    %c0_i32 = arith.constant 0 : i32
    %c0_i32_0 = arith.constant 0 : i32
    %c0_i32_1 = arith.constant 0 : i32
    return %c0_i32, %c0_i32_0 : i32, i32
  }
  func.func @transform_9(%arg0: i32) -> (i32, i32) {
    %c0_i32 = arith.constant 0 : i32
    %c0_i32_0 = arith.constant 0 : i32
    %c0_i32_1 = arith.constant 0 : i32
    return %c0_i32, %c0_i32_0 : i32, i32
  }
  func.func @transform_10(%arg0: i32) -> (i32, i32) {
    %c0_i32 = arith.constant 0 : i32
    %c0_i32_0 = arith.constant 0 : i32
    %c0_i32_1 = arith.constant 0 : i32
    return %c0_i32, %c0_i32_0 : i32, i32
  }
  func.func @transform_11(%arg0: i32) -> (i32, i32) {
    %c0_i32 = arith.constant 0 : i32
    %c0_i32_0 = arith.constant 0 : i32
    %c0_i32_1 = arith.constant 0 : i32
    return %c0_i32, %c0_i32_0 : i32, i32
  }
  func.func @transform_12(%arg0: i32) -> (i32, i32) {
    %c0_i32 = arith.constant 0 : i32
    %c0_i32_0 = arith.constant 0 : i32
    return %arg0, %c0_i32 : i32, i32
  }
}

</mosaic_0001>

<llo_original>
// kernel: tpu_custom_call.1
$region0: #{tpu_custom_call.1}
  #allocation0 [shape = 'u32[]', space=smem, size = 0x4, offset = 0x4, fixed_abs, tag = 'smem constant byte address 0x4 - core index']
  #allocation1 [shape = 'u32[72,128]{1,0:T(1,128)}', space=vmem, size = 0x9000, scoped, tag = 'internal scratch']
  %s0 = inlined_call_operand.vmem [shape: f32[16,4], index: 0, kind: input, shape index: {}]
  %s1 = inlined_call_operand.vmem [shape: f32[16,4], index: 1, kind: input, shape index: {}]
  %s2 = inlined_call_operand.vmem [shape: bf16[2,16], index: 2, kind: input, shape index: {}]
  %s3 = inlined_call_operand.vmem [shape: bf16[4,32], index: 3, kind: input, shape index: {}]
  %s4 = inlined_call_operand.vmem [shape: bf16[4,32], index: 4, kind: input, shape index: {}]
  %s5 = inlined_call_operand.vmem [shape: f32[1,32], index: 5, kind: input, shape index: {}]
  %s6 = inlined_call_operand.vmem [shape: bf16[32,32], index: 6, kind: input, shape index: {}]
  %s7 = inlined_call_operand.vmem [shape: f32[1,32], index: 7, kind: input, shape index: {}]
  %s8 = inlined_call_operand.vmem [shape: bf16[32,32], index: 8, kind: input, shape index: {}]
  %s9 = inlined_call_operand.vmem [shape: f32[1,32], index: 9, kind: input, shape index: {}]
  %s10 = inlined_call_operand.vmem [shape: bf16[32,16], index: 10, kind: input, shape index: {}]
  %s11 = inlined_call_operand.vmem [shape: f32[1,16], index: 11, kind: input, shape index: {}]
  %s12 = inlined_call_operand.hbm [shape: f32[2,16], index: 12, kind: output, shape index: {}]
  %s13 = sld [smem:[#allocation0]]
  $region58: #{tpu_custom_call.1} parent=0
    _
  %s15 = ssub.s32 1, %s13
  %s16 = scalar_select 0, %s15, %s13
  $region1: #{tpu_custom_call.1} parent=0
    #allocation2 [shape = 'u8[1024]{0}', space=vmem, size = 0x400, scoped, tag = 'output window, operand 0, single buffered']
    #allocation3 [shape = 's32[1]{0}', space=sflag, size = 0x4, scoped, tag = 'scoped memory for tpu_custom_call.1']
    %17 = vsyncpa [#allocation3], 0
    // Predicated region
    $region2: #{tpu_custom_call.1} parent=1 // pred_check
      _
    $region3: #{tpu_custom_call.1} parent=1 // pred_check_branch
      %19 = sbr.rel (0) target = $region5
    $region4: #{tpu_custom_call.1} parent=1 // pred_region
      _
    $region5: #{tpu_custom_call.1} parent=1 // pred_fallthru
      _
    // Predicated region
    $region6: #{tpu_custom_call.1} parent=1 // pred_check
      _
    $region7: #{tpu_custom_call.1} parent=1 // pred_check_branch
      %21 = sbr.rel (0) target = $region9
    $region8: #{tpu_custom_call.1} parent=1 // pred_region
      _
    $region9: #{tpu_custom_call.1} parent=1 // pred_fallthru
      _
    // Predicated region
    $region10: #{tpu_custom_call.1} parent=1 // pred_check
      _
    $region11: #{tpu_custom_call.1} parent=1 // pred_check_branch
      %23 = sbr.rel (0) target = $region13
    $region12: #{tpu_custom_call.1} parent=1 // pred_region
      _
    $region13: #{tpu_custom_call.1} parent=1 // pred_fallthru
      _
    // Predicated region
    $region14: #{tpu_custom_call.1} parent=1 // pred_check
      _
    $region15: #{tpu_custom_call.1} parent=1 // pred_check_branch
      %25 = sbr.rel (0) target = $region17
    $region16: #{tpu_custom_call.1} parent=1 // pred_region
      _
    $region17: #{tpu_custom_call.1} parent=1 // pred_fallthru
      _
    // Predicated region
    $region18: #{tpu_custom_call.1} parent=1 // pred_check
      _
    $region19: #{tpu_custom_call.1} parent=1 // pred_check_branch
      %27 = sbr.rel (0) target = $region21
    $region20: #{tpu_custom_call.1} parent=1 // pred_region
      _
    $region21: #{tpu_custom_call.1} parent=1 // pred_fallthru
      _
    // Predicated region
    $region22: #{tpu_custom_call.1} parent=1 // pred_check
      _
    $region23: #{tpu_custom_call.1} parent=1 // pred_check_branch
      %29 = sbr.rel (0) target = $region25
    $region24: #{tpu_custom_call.1} parent=1 // pred_region
      _
    $region25: #{tpu_custom_call.1} parent=1 // pred_fallthru
      _
    // Predicated region
    $region26: #{tpu_custom_call.1} parent=1 // pred_check
      _
    $region27: #{tpu_custom_call.1} parent=1 // pred_check_branch
      %31 = sbr.rel (0) target = $region29
    $region28: #{tpu_custom_call.1} parent=1 // pred_region
      _
    $region29: #{tpu_custom_call.1} parent=1 // pred_fallthru
      _
    // Predicated region
    $region30: #{tpu_custom_call.1} parent=1 // pred_check
      _
    $region31: #{tpu_custom_call.1} parent=1 // pred_check_branch
      %33 = sbr.rel (0) target = $region33
    $region32: #{tpu_custom_call.1} parent=1 // pred_region
      _
    $region33: #{tpu_custom_call.1} parent=1 // pred_fallthru
      _
    // Predicated region
    $region34: #{tpu_custom_call.1} parent=1 // pred_check
      _
    $region35: #{tpu_custom_call.1} parent=1 // pred_check_branch
      %35 = sbr.rel (0) target = $region37
    $region36: #{tpu_custom_call.1} parent=1 // pred_region
      _
    $region37: #{tpu_custom_call.1} parent=1 // pred_fallthru
      _
    // Predicated region
    $region38: #{tpu_custom_call.1} parent=1 // pred_check
      _
    $region39: #{tpu_custom_call.1} parent=1 // pred_check_branch
      %37 = sbr.rel (0) target = $region41
    $region40: #{tpu_custom_call.1} parent=1 // pred_region
      _
    $region41: #{tpu_custom_call.1} parent=1 // pred_fallthru
      _
    // Predicated region
    $region42: #{tpu_custom_call.1} parent=1 // pred_check
      _
    $region43: #{tpu_custom_call.1} parent=1 // pred_check_branch
      %39 = sbr.rel (0) target = $region45
    $region44: #{tpu_custom_call.1} parent=1 // pred_region
      _
    $region45: #{tpu_custom_call.1} parent=1 // pred_fallthru
      _
    // Predicated region
    $region46: #{tpu_custom_call.1} parent=1 // pred_check
      _
    $region47: #{tpu_custom_call.1} parent=1 // pred_check_branch
      %41 = sbr.rel (0) target = $region49
    $region48: #{tpu_custom_call.1} parent=1 // pred_region
      _
    $region49: #{tpu_custom_call.1} parent=1 // pred_fallthru
      _
    %v43 = vld [vmem:[%s0] sm:$0xff]
    %v44 = vld [vmem:[%s0 + $0x8] sm:$0xff]
    %v45 = vpack.c.bf16 %v44, %v43
    %v46 = vld [vmem:[%s1] sm:$0xff]
    %v47 = vld [vmem:[%s1 + $0x8] sm:$0xff]
    %v48 = vpack.c.bf16 %v47, %v46
    %v49 = vld [vmem:[%s3] sm:$0x3]
    %v50 = vld [vmem:[%s4] sm:$0x3]
    %vm51 = vcmask 31744
    %v53 = vsel %vm51, %v48, 0
    %vm55 = vcmask 1041408
    %v57 = vsel %vm55, %v50, 0
    %59 = vmatpush.bf16.msra.mxu0 0
    %60 = vmatpush.bf16.msra.mxu0 0
    %61 = vmatpush.bf16.msra.mxu0 0
    %62 = vmatpush.bf16.msra.mxu0 0
    %63 = vmatpush.bf16.msra.mxu0 0
    %64 = vmatpush.bf16.msra.mxu0 0
    %65 = vmatpush.bf16.msra.mxu0 0
    %66 = vmatpush.bf16.msra.mxu0 %v57
    %67 = vmatmul.bf16.gmra.mxu0 %v53
    %v68 = vpop.f32.mrf.mxu0
    %v69 = vadd.f32 0.0, %v68
    %v70 = vpop.f32.mrf.mxu0
    %v71 = vadd.f32 0.0, %v70
    %72 = vdwg.mxu0
    %v74 = vsel %vm51, %v45, 0
    %v77 = vsel %vm55, %v49, 0
    %79 = vmatpush.bf16.msra.mxu0 0
    %80 = vmatpush.bf16.msra.mxu0 0
    %81 = vmatpush.bf16.msra.mxu0 0
    %82 = vmatpush.bf16.msra.mxu0 0
    %83 = vmatpush.bf16.msra.mxu0 0
    %84 = vmatpush.bf16.msra.mxu0 0
    %85 = vmatpush.bf16.msra.mxu0 0
    %86 = vmatpush.bf16.msra.mxu0 %v77
    %87 = vmatmul.bf16.gmra.mxu0 %v74
    %v88 = vpop.f32.mrf.mxu0
    %v89 = vadd.f32 %v69, %v88
    %v90 = vpop.f32.mrf.mxu0
    %v91 = vadd.f32 %v71, %v90
    %92 = vdwg.mxu0
    %v93 = vld [vmem:[%s5] sm:$0x1]
    %v95 = vperm.slane %v93, 0
    %v97 = vadd.f32 %v89, %v95
    %v98 = vadd.f32 %v91, %v95
    %v99 = vmax.f32 %v97, 0.0
    %v100 = vmax.f32 %v98, 0.0
    %v101 = vpack.c.bf16 %v100, %v99
    %v102 = vld [vmem:[%s6] sm:$0xf]
    %v103 = vld [vmem:[%s6 + $0x4] sm:$0xf]
    %v104 = vld [vmem:[%s6 + $0x8] sm:$0xf]
    %v105 = vld [vmem:[%s6 + $0xc] sm:$0xf]
    %v106 = vld [vmem:[%s7] sm:$0x1]
    %v108 = vperm.slane %v106, 0
    %v114 = vunpack.c.l.b16 %v102
    %v115 = vunpack.c.l.b16 %v103
    %v116 = vunpack.c.l.b16 %v104
    %v117 = vunpack.c.l.b16 %v105
    %v118 = vpack.c.b16 %v115, %v114
    %v119 = vpack.c.b16 %v117, %v116
    %vm122 = vcmask 261120
    %v124 = vsel %vm122, %v101, 0
    %126 = vmatpush.bf16.msra.mxu0 0
    %127 = vmatpush.bf16.msra.mxu0 0
    %128 = vmatpush.bf16.msra.mxu0 0
    %129 = vmatpush.bf16.msra.mxu0 0
    %130 = vmatpush.bf16.msra.mxu0 0
    %131 = vmatpush.bf16.msra.mxu0 0
    %132 = vmatpush.bf16.msra.mxu0 %v119
    %133 = vmatpush.bf16.msra.mxu0 %v118
    %134 = vmatmul.bf16.gmra.mxu0 %v124
    %v135 = vpop.f32.mrf.mxu0
    %v136 = vadd.f32 %v108, %v135
    %v137 = vpop.f32.mrf.mxu0
    %v138 = vadd.f32 %v108, %v137
    %139 = vdwg.mxu0
    %v140 = vmax.f32 %v136, 0.0
    %v141 = vmax.f32 %v138, 0.0
    %v142 = vpack.c.bf16 %v141, %v140
    %v143 = vld [vmem:[%s8] sm:$0xf]
    %v144 = vld [vmem:[%s8 + $0x4] sm:$0xf]
    %v145 = vld [vmem:[%s8 + $0x8] sm:$0xf]
    %v146 = vld [vmem:[%s8 + $0xc] sm:$0xf]
    %v147 = vld [vmem:[%s9] sm:$0x1]
    %v149 = vperm.slane %v147, 0
    %v155 = vunpack.c.l.b16 %v143
    %v156 = vunpack.c.l.b16 %v144
    %v157 = vunpack.c.l.b16 %v145
    %v158 = vunpack.c.l.b16 %v146
    %v159 = vpack.c.b16 %v156, %v155
    %v160 = vpack.c.b16 %v158, %v157
    %v164 = vsel %vm122, %v142, 0
    %166 = vmatpush.bf16.msra.mxu0 0
    %167 = vmatpush.bf16.msra.mxu0 0
    %168 = vmatpush.bf16.msra.mxu0 0
    %169 = vmatpush.bf16.msra.mxu0 0
    %170 = vmatpush.bf16.msra.mxu0 0
    %171 = vmatpush.bf16.msra.mxu0 0
    %172 = vmatpush.bf16.msra.mxu0 %v160
    %173 = vmatpush.bf16.msra.mxu0 %v159
    %174 = vmatmul.bf16.gmra.mxu0 %v164
    %v175 = vpop.f32.mrf.mxu0
    %v176 = vadd.f32 %v149, %v175
    %v177 = vpop.f32.mrf.mxu0
    %v178 = vadd.f32 %v149, %v177
    %179 = vdwg.mxu0
    %v180 = vmax.f32 %v176, 0.0
    %v181 = vmax.f32 %v178, 0.0
    %v182 = vpack.c.bf16 %v181, %v180
    %v183 = vld [vmem:[%s10] sm:$0xf]
    %v184 = vld [vmem:[%s10 + $0x4] sm:$0xf]
    %v185 = vld [vmem:[%s10 + $0x8] sm:$0xf]
    %v186 = vld [vmem:[%s10 + $0xc] sm:$0xf]
    %v187 = vld [vmem:[%s11] sm:$0x1]
    %v189 = vperm.slane %v187, 0
    %v195 = vunpack.c.l.b16 %v183
    %v196 = vunpack.c.l.b16 %v184
    %v197 = vunpack.c.l.b16 %v185
    %v198 = vunpack.c.l.b16 %v186
    %v199 = vpack.c.b16 %v196, %v195
    %v200 = vpack.c.b16 %v198, %v197
    %v204 = vsel %vm122, %v182, 0
    %206 = vmatpush.bf16.msra.mxu0 0
    %207 = vmatpush.bf16.msra.mxu0 0
    %208 = vmatpush.bf16.msra.mxu0 0
    %209 = vmatpush.bf16.msra.mxu0 0
    %210 = vmatpush.bf16.msra.mxu0 0
    %211 = vmatpush.bf16.msra.mxu0 0
    %212 = vmatpush.bf16.msra.mxu0 %v200
    %213 = vmatpush.bf16.msra.mxu0 %v199
    %214 = vmatmul.bf16.gmra.mxu0 %v204
    %v215 = vpop.f32.mrf.mxu0
    %v216 = vadd.f32 %v189, %v215
    %v217 = vpop.f32.mrf.mxu0
    %v218 = vadd.f32 %v189, %v217
    %219 = vdwg.mxu0
    %v220 = vmax.f32 %v216, 0.0
    %v221 = vmax.f32 %v218, 0.0
    %v222 = vld [vmem:[%s2] sm:$0x1]
    %v223 = vpack.c.bf16 %v221, %v220
    %vm224 = vcmask 130048
    %v226 = vsel %vm224, %v222, 0
    %228 = vmatpush.bf16.msra.mxu0 0
    %229 = vmatpush.bf16.msra.mxu0 0
    %230 = vmatpush.bf16.msra.mxu0 0
    %231 = vmatpush.bf16.msra.mxu0 0
    %232 = vmatpush.bf16.msra.mxu0 0
    %233 = vmatpush.bf16.msra.mxu0 0
    %234 = vmatpush.bf16.msra.mxu0 0
    %235 = vmatpush.bf16.msra.mxu0 %v223
    %236 = vmatmul.bf16.gmra.mxu0 %v226
    %v237 = vpop.f32.mrf.mxu0
    %v238 = vadd.f32 0.0, %v237
    %v239 = vpop.f32.mrf.mxu0
    %240 = vdwg.mxu0
    %v241 = vmul.f32 %v238, 0.125
    %vm242 = vcmask 123904
    %243 = vst.msk [vmem:[#allocation2] sm:$0x3] %vm242, %v241
    // Predicated region
    $region50: #{tpu_custom_call.1} parent=1 // pred_check
      _
    $region51: #{tpu_custom_call.1} parent=1 // pred_check_branch
      %245 = sbr.rel (0) target = $region53
    $region52: #{tpu_custom_call.1} parent=1 // pred_region
      %247 = vsyncadd [#allocation3], 0
      %s249 = sshll.u32 [#allocation2], 4
      %s250 = int_to_ptr.vmem [resolvable:$true] %s249
      %s251 = sshll.u32 %s12, 4
      %s252 = int_to_ptr.hbm [resolvable:$true] %s251
      %254 = dma.vmem_to_hbm [thread:$0]  %s250, 32, %s252, [#allocation3]
    $region53: #{tpu_custom_call.1} parent=1 // pred_fallthru
      _
    // Predicated region
    $region54: #{tpu_custom_call.1} parent=1 // pred_check
      _
    $region55: #{tpu_custom_call.1} parent=1 // pred_check_branch
      %256 = sbr.rel (0) target = $region57
    $region56: #{tpu_custom_call.1} parent=1 // pred_region
      %258 = dma.done [#allocation3], 32
    $region57: #{tpu_custom_call.1} parent=1 // pred_fallthru
      _
    %259 = vsyncpa [#allocation3], 1

</llo_original>
